<compile_context>
chip_gen: v7x
topology: tpu7x:2x2x1
jax: 0.10.0
libtpu: 0.0.40
codegen_flags: <defaults>
</compile_context>

<pallas_src>
import functools

import jax
import jax.numpy as jnp
from jax.experimental import pallas as pl
from jax.experimental.pallas import tpu as pltpu

LANE = 128  # lane width / channel padding target


def _round_up(x, m):
    return (x + m - 1) // m * m


def _tiles_for(n):
    """Return (padded N, row tile TM, reduction tile TK).

    Small graphs run as a single full block (one grid step); large graphs use
    512x512 adjacency blocks (VMEM use is independent of N thanks to K-tiling).
    """
    if n <= 512:
        t = _round_up(max(n, 1), LANE)
        return t, t, t
    np_ = _round_up(n, 512)
    return np_, 512, 512


# -----------------------------------------------------------------------------
# Pallas kernel: one GCN layer, tiled over (row tile i, reduction tile k).
#   adj_ref : (TM, TK)        bf16  -- streamed block of D^-1/2 (A+I) D^-1/2
#   x_ref   : (TK, Cin_p)     bf16  -- streamed block of node features
#   w_ref   : (Cin_p, Cout_p) bf16  -- resident (constant index_map)
#   b_ref   : (1, Cout_p)     f32   -- resident
#   o_ref   : (TM, Cout_p)          -- written on the last k step
#   acc_ref : (TM, Cin_p)     f32   -- aggregation accumulator (VMEM scratch)
# aggregate-then-transform:  o = relu?( (sum_k adj_blk @ x_blk) @ W + b )
# -----------------------------------------------------------------------------
def gcn_layer_kernel(adj_ref, x_ref, w_ref, b_ref, o_ref, acc_ref, *, apply_relu):
    k = pl.program_id(1)

    @pl.when(k == 0)
    def _():
        acc_ref[...] = jnp.zeros_like(acc_ref)

    acc_ref[...] += jnp.dot(adj_ref[...], x_ref[...],
                            preferred_element_type=jnp.float32)

    @pl.when(k == pl.num_programs(1) - 1)
    def _():
        y = jnp.dot(acc_ref[...].astype(jnp.bfloat16), w_ref[...],
                    preferred_element_type=jnp.float32)
        y = y + b_ref[...]
        if apply_relu:
            y = jnp.maximum(y, 0.0)
        o_ref[...] = y.astype(o_ref.dtype)


def _gcn_layer(adj, feats, w, b, *, apply_relu, out_dtype, tm, tk):
    np_ = adj.shape[0]
    cin_p = feats.shape[1]
    cout_p = w.shape[1]
    assert np_ % tm == 0 and np_ % tk == 0

    kernel = functools.partial(gcn_layer_kernel, apply_relu=apply_relu)
    return pl.pallas_call(
        kernel,
        out_shape=jax.ShapeDtypeStruct((np_, cout_p), out_dtype),
        grid_spec=pltpu.PrefetchScalarGridSpec(
            num_scalar_prefetch=0,
            grid=(np_ // tm, np_ // tk),                            # K innermost
            in_specs=[
                pl.BlockSpec((tm, tk), lambda i, k: (i, k)),        # adj block (streamed)
                pl.BlockSpec((tk, cin_p), lambda i, k: (k, 0)),     # features (streamed over K)
                pl.BlockSpec((cin_p, cout_p), lambda i, k: (0, 0)),  # weights (resident, ~32 KiB)
                pl.BlockSpec((1, cout_p), lambda i, k: (0, 0)),      # bias (resident)
            ],
            out_specs=pl.BlockSpec((tm, cout_p), lambda i, k: (i, 0)),
            scratch_shapes=[pltpu.VMEM((tm, cin_p), jnp.float32)],
        ),
        compiler_params=pltpu.CompilerParams(
            dimension_semantics=("parallel", "arbitrary"),  # megacore on v7x
            vmem_limit_bytes=48 * 1024 * 1024,              # headroom under v7x's 64 MiB
        ),
    )(adj, feats, w, b)


def node_gcn_forward(adj, x, w1, b1, w2, b2, *, tm=None, tk=None):
    """Fused NodeGCN forward: relu(Ahat @ x @ W1 + b1) -> Ahat @ h @ W2 + b2."""
    n, c_in = x.shape
    c_hid = w1.shape[1]
    c_out = w2.shape[1]

    np_, tm_d, tk_d = _tiles_for(n)
    tm = tm_d if tm is None else tm
    tk = tk_d if tk is None else tk
    np_ = _round_up(_round_up(np_, tm), tk)

    cin_p = _round_up(c_in, LANE)
    chid_p = _round_up(c_hid, LANE)
    cout_p = _round_up(c_out, LANE)

    pad2 = lambda a, r, c: jnp.pad(a, ((0, r - a.shape[0]), (0, c - a.shape[1])))

    # Prefer passing the adjacency already padded + bf16 (built via
    # build_normalized_adjacency(..., padded_nodes=..., dtype=bf16)) so no extra
    # N^2 pad/cast pass over HBM is added here.
    if adj.shape != (np_, np_) or adj.dtype != jnp.bfloat16:
        adj = pad2(adj, np_, np_).astype(jnp.bfloat16)

    x_p = pad2(x, np_, cin_p).astype(jnp.bfloat16)
    w1_p = pad2(w1, cin_p, chid_p).astype(jnp.bfloat16)
    w2_p = pad2(w2, chid_p, cout_p).astype(jnp.bfloat16)
    b1_p = pad2(b1, 1, chid_p).astype(jnp.float32)
    b2_p = pad2(b2, 1, cout_p).astype(jnp.float32)

    # Padded adjacency *columns* are exactly zero, so padded rows of H (= relu(b1))
    # never leak into real outputs; final slice drops padded rows/channels.
    h = _gcn_layer(adj, x_p, w1_p, b1_p,
                   apply_relu=True, out_dtype=jnp.bfloat16, tm=tm, tk=tk)
    out = _gcn_layer(adj, h, w2_p, b2_p,
                     apply_relu=False, out_dtype=jnp.float32, tm=tm, tk=tk)
    return out[:n, :c_out]


# -----------------------------------------------------------------------------
# Plain-JAX glue: symmetric-normalized dense adjacency from edge_index,
# built directly at the padded shape and cast once (mirrors torch_geometric
# gcn_norm; self-loops added only where missing).
# -----------------------------------------------------------------------------
def build_normalized_adjacency(edge_index, num_nodes, *, padded_nodes=None,
                               dtype=jnp.float32):
    np_ = num_nodes if padded_nodes is None else padded_nodes
    src, dst = edge_index[0], edge_index[1]
    A = jnp.zeros((np_, np_), jnp.float32).at[dst, src].add(1.0)
    diag = jnp.arange(num_nodes)
    missing = (A[diag, diag] == 0).astype(jnp.float32)
    A = A.at[diag, diag].add(missing)              # add_remaining_self_loops
    deg = jnp.sum(A, axis=1)
    d = jnp.where(deg > 0, 1.0 / jnp.sqrt(deg), 0.0)
    return (d[:, None] * A * d[None, :]).astype(dtype)


# -----------------------------------------------------------------------------
# Reference (plain JAX) mirroring the kernel's dtype pipeline
# -----------------------------------------------------------------------------
def node_gcn_ref(adj, x, w1, b1, w2, b2):
    f32, bf16 = jnp.float32, jnp.bfloat16
    a = adj.astype(bf16)

    def layer(feats_bf, w, b, relu):
        z = jnp.dot(a, feats_bf, preferred_element_type=f32)
        y = jnp.dot(z.astype(bf16), w.astype(bf16), preferred_element_type=f32) + b
        return jnp.maximum(y, 0.0) if relu else y

    h = layer(x.astype(bf16), w1, b1, True).astype(bf16)
    return layer(h, w2, b2, False)


if __name__ == "__main__":
    key = jax.random.PRNGKey(0)
    k_x, k_e, k_w1, k_w2 = jax.random.split(key, 4)

    # small, module-consistent sizes
    N = 32           # number of graph nodes
    C_IN = 8         # in_channels
    C_HID = 32       # hidden_channels
    C_OUT = 16       # out_channels
    E = 64           # number of edges

    x = jax.random.normal(k_x, (N, C_IN), jnp.float32)
    edge_index = jax.random.randint(k_e, (2, E), 0, N, jnp.int32)

    # Glorot-style weights, zero biases (as in GCNConv init)
    w1 = jax.random.normal(k_w1, (C_IN, C_HID), jnp.float32) / jnp.sqrt(C_IN)
    b1 = jnp.zeros((1, C_HID), jnp.float32)
    w2 = jax.random.normal(k_w2, (C_HID, C_OUT), jnp.float32) / jnp.sqrt(C_HID)
    b2 = jnp.zeros((1, C_OUT), jnp.float32)

    # build the adjacency directly at the padded shape, already in bf16
    np_pad, _, _ = _tiles_for(N)
    adj = build_normalized_adjacency(edge_index, N, padded_nodes=np_pad,
                                     dtype=jnp.bfloat16)

    out = jax.block_until_ready(node_gcn_forward(adj, x, w1, b1, w2, b2))
    ref = node_gcn_ref(adj[:N, :N].astype(jnp.float32), x, w1, b1, w2, b2)

    assert out.shape == (N, C_OUT)
    assert jnp.allclose(out, ref, atol=2e-2, rtol=2e-2), \
        float(jnp.max(jnp.abs(out - ref)))

    print("KERNEL_OK")
</pallas_src>

<mosaic_0001>
module attributes {stable_mosaic.version = 11 : i64} {
  func.func @gcn_layer_kernel(%arg0: i32, %arg1: i32, %arg2: memref<128x128xbf16, #tpu.memory_space<vmem>>, %arg3: memref<128x128xbf16, #tpu.memory_space<vmem>>, %arg4: memref<128x128xbf16, #tpu.memory_space<vmem>>, %arg5: memref<1x128xf32, #tpu.memory_space<vmem>>, %arg6: memref<128x128xbf16, #tpu.memory_space<vmem>>, %arg7: memref<128x128xf32, #tpu.memory_space<vmem>>) attributes {dimension_semantics = [#tpu.dimension_semantics<parallel>, #tpu.dimension_semantics<arbitrary>], iteration_bounds = array<i64: 1, 1>, scalar_prefetch = 0 : i64, scratch_operands = 1 : i64, tpu.core_type = #tpu.core_type<tc>, window_params = [{transform_indices = @transform_0, window_bounds = array<i64: 128, 128>}, {transform_indices = @transform_1, window_bounds = array<i64: 128, 128>}, {pipeline_mode = #tpu.pipeline_mode<synchronous>, transform_indices = @transform_2, window_bounds = array<i64: 128, 128>}, {pipeline_mode = #tpu.pipeline_mode<synchronous>, transform_indices = @transform_3, window_bounds = array<i64: 1, 128>}, {transform_indices = @transform_4, window_bounds = array<i64: 128, 128>}]} {
    %c0_i32 = arith.constant 0 : i32
    %0 = arith.cmpi eq, %arg1, %c0_i32 : i32
    %1 = arith.extui %0 : i1 to i32
    %c0_i32_0 = arith.constant 0 : i32
    %2 = arith.cmpi ne, %1, %c0_i32_0 : i32
    scf.if %2 {
      %cst_10 = arith.constant 0.000000e+00 : f32
      %12 = vector.broadcast %cst_10 : f32 to vector<128x128xf32>
      %c0_11 = arith.constant 0 : index
      %c0_12 = arith.constant 0 : index
      %13 = vector.load %arg7[%c0_11, %c0_12] : memref<128x128xf32, #tpu.memory_space<vmem>>, vector<128x128xf32>
      tpu.vector_store %arg7[%c0_11, %c0_12], %12 {strides = array<i32>} : memref<128x128xf32, #tpu.memory_space<vmem>>, vector<128x128xf32>,
    } else {
    }
    %c0 = arith.constant 0 : index
    %c0_1 = arith.constant 0 : index
    %3 = vector.load %arg7[%c0, %c0_1] : memref<128x128xf32, #tpu.memory_space<vmem>>, vector<128x128xf32>
    %c0_2 = arith.constant 0 : index
    %c0_3 = arith.constant 0 : index
    %4 = vector.load %arg2[%c0_2, %c0_3] : memref<128x128xbf16, #tpu.memory_space<vmem>>, vector<128x128xbf16>
    %c0_4 = arith.constant 0 : index
    %c0_5 = arith.constant 0 : index
    %5 = vector.load %arg3[%c0_4, %c0_5] : memref<128x128xbf16, #tpu.memory_space<vmem>>, vector<128x128xbf16>
    %cst = arith.constant dense<0.000000e+00> : vector<128x128xf32>
    %6 = tpu.matmul %4, %5, %cst {dimension_numbers = #tpu.dot_dimension_numbers<[1], [0], [0], [1], [0, 0, 1, 1], [], []>} : vector<128x128xbf16>, vector<128x128xbf16>, vector<128x128xf32> -> vector<128x128xf32>
    %7 = arith.addf %3, %6 : vector<128x128xf32>
    %c0_6 = arith.constant 0 : index
    %c0_7 = arith.constant 0 : index
    %8 = vector.load %arg7[%c0_6, %c0_7] : memref<128x128xf32, #tpu.memory_space<vmem>>, vector<128x128xf32>
    tpu.vector_store %arg7[%c0_6, %c0_7], %7 {strides = array<i32>} : memref<128x128xf32, #tpu.memory_space<vmem>>, vector<128x128xf32>,
    %c0_i32_8 = arith.constant 0 : i32
    %9 = arith.cmpi eq, %arg1, %c0_i32_8 : i32
    %10 = arith.extui %9 : i1 to i32
    %c0_i32_9 = arith.constant 0 : i32
    %11 = arith.cmpi ne, %10, %c0_i32_9 : i32
    scf.if %11 {
      %c0_10 = arith.constant 0 : index
      %c0_11 = arith.constant 0 : index
      %12 = vector.load %arg7[%c0_10, %c0_11] : memref<128x128xf32, #tpu.memory_space<vmem>>, vector<128x128xf32>
      %13 = arith.truncf %12 : vector<128x128xf32> to vector<128x128xbf16>
      %c0_12 = arith.constant 0 : index
      %c0_13 = arith.constant 0 : index
      %14 = vector.load %arg4[%c0_12, %c0_13] : memref<128x128xbf16, #tpu.memory_space<vmem>>, vector<128x128xbf16>
      %cst_14 = arith.constant dense<0.000000e+00> : vector<128x128xf32>
      %15 = tpu.matmul %13, %14, %cst_14 {dimension_numbers = #tpu.dot_dimension_numbers<[1], [0], [0], [1], [0, 0, 1, 1], [], []>} : vector<128x128xbf16>, vector<128x128xbf16>, vector<128x128xf32> -> vector<128x128xf32>
      %c0_15 = arith.constant 0 : index
      %c0_16 = arith.constant 0 : index
      %16 = vector.load %arg5[%c0_15, %c0_16] : memref<1x128xf32, #tpu.memory_space<vmem>>, vector<1x128xf32>
      %17 = vector.broadcast %16 : vector<1x128xf32> to vector<128x128xf32>
      %18 = arith.addf %15, %17 : vector<128x128xf32>
      %cst_17 = arith.constant 0.000000e+00 : f32
      %19 = vector.broadcast %cst_17 : f32 to vector<128x128xf32>
      %20 = arith.maximumf %18, %19 : vector<128x128xf32>
      %21 = arith.truncf %20 : vector<128x128xf32> to vector<128x128xbf16>
      %c0_18 = arith.constant 0 : index
      %c0_19 = arith.constant 0 : index
      %22 = vector.load %arg6[%c0_18, %c0_19] : memref<128x128xbf16, #tpu.memory_space<vmem>>, vector<128x128xbf16>
      tpu.vector_store %arg6[%c0_18, %c0_19], %21 {strides = array<i32>} : memref<128x128xbf16, #tpu.memory_space<vmem>>, vector<128x128xbf16>,
    } else {
    }
    return
  }
  func.func @transform_0(%arg0: i32, %arg1: i32) -> (i32, i32) {
    %c0_i32 = arith.constant 0 : i32
    return %arg0, %arg1 : i32, i32
  }
  func.func @transform_1(%arg0: i32, %arg1: i32) -> (i32, i32) {
    %c0_i32 = arith.constant 0 : i32
    %c0_i32_0 = arith.constant 0 : i32
    return %arg1, %c0_i32 : i32, i32
  }
  func.func @transform_2(%arg0: i32, %arg1: i32) -> (i32, i32) {
    %c0_i32 = arith.constant 0 : i32
    %c0_i32_0 = arith.constant 0 : i32
    %c0_i32_1 = arith.constant 0 : i32
    return %c0_i32, %c0_i32_0 : i32, i32
  }
  func.func @transform_3(%arg0: i32, %arg1: i32) -> (i32, i32) {
    %c0_i32 = arith.constant 0 : i32
    %c0_i32_0 = arith.constant 0 : i32
    %c0_i32_1 = arith.constant 0 : i32
    return %c0_i32, %c0_i32_0 : i32, i32
  }
  func.func @transform_4(%arg0: i32, %arg1: i32) -> (i32, i32) {
    %c0_i32 = arith.constant 0 : i32
    %c0_i32_0 = arith.constant 0 : i32
    return %arg0, %c0_i32 : i32, i32
  }
}

</mosaic_0001>

<llo_original>
// kernel: tpu_custom_call.1
$region0: #{tpu_custom_call.1}
  #allocation0 [shape = 'u32[]', space=smem, size = 0x4, offset = 0x4, fixed_abs, tag = 'smem constant byte address 0x4 - core index']
  #allocation1 [shape = 'u32[144,128]{1,0:T(1,128)}', space=vmem, size = 0x12000, scoped, tag = 'internal scratch']
  #allocation2 [shape = 'f32[128,128]{1,0:T(8,128)}', space=vmem, size = 0x10000, scoped, tag = 'scratch operand']
  %s0 = inlined_call_operand.hbm [shape: bf16[128,128], index: 0, kind: input, shape index: {}]
  %s1 = inlined_call_operand.hbm [shape: bf16[128,128], index: 1, kind: input, shape index: {}]
  %s2 = inlined_call_operand.hbm [shape: bf16[128,128], index: 2, kind: input, shape index: {}]
  %s3 = inlined_call_operand.vmem [shape: f32[1,128], index: 3, kind: input, shape index: {}]
  %s4 = inlined_call_operand.hbm [shape: bf16[128,128], index: 4, kind: output, shape index: {}]
  %s5 = sld [smem:[#allocation0]]
  $region46: #{tpu_custom_call.1} parent=0
    _
  %s7 = ssub.s32 1, %s5
  %s8 = scalar_select 0, %s7, %s5
  $region1: #{tpu_custom_call.1} parent=0
    #allocation3 [shape = 'u8[32768]{0}', space=vmem, size = 0x8000, scoped, tag = 'input window, operand 0, single buffered']
    #allocation4 [shape = 's32[1]{0}', space=sflag, size = 0x4, scoped, tag = 'scoped memory for tpu_custom_call.1']
    #allocation5 [shape = 's32[1]{0}', space=sflag, size = 0x4, scoped, tag = 'scoped memory for tpu_custom_call.1']
    #allocation6 [shape = 'u8[32768]{0}', space=vmem, size = 0x8000, scoped, tag = 'input window, operand 1, single buffered']
    #allocation7 [shape = 's32[1]{0}', space=sflag, size = 0x4, scoped, tag = 'scoped memory for tpu_custom_call.1']
    #allocation8 [shape = 'u8[32768]{0}', space=vmem, size = 0x8000, scoped, tag = 'input window, operand 2, single buffered']
    #allocation9 [shape = 'u8[32768]{0}', space=vmem, size = 0x8000, scoped, tag = 'output window, operand 0, single buffered']
    %9 = vsyncpa [#allocation4], 0
    %10 = vsyncpa [#allocation7], 0
    %11 = vsyncpa [#allocation5], 0
    // Predicated region
    $region2: #{tpu_custom_call.1} parent=1 // pred_check
      _
    $region3: #{tpu_custom_call.1} parent=1 // pred_check_branch
      %13 = sbr.rel (0) target = $region5
    $region4: #{tpu_custom_call.1} parent=1 // pred_region
      %s15 = ssub.s32 1024, 1024
      %16 = vsyncadd [#allocation4], %s15
      %s17 = sshll.u32 [#allocation3], 4
      %s18 = int_to_ptr.vmem [resolvable:$true] %s17
      %23 = dma.hbm_to_vmem [thread:$0]  %s0, 1024, %s18, [#allocation4], 64, 64, 4
    $region5: #{tpu_custom_call.1} parent=1 // pred_fallthru
      _
    // Predicated region
    $region6: #{tpu_custom_call.1} parent=1 // pred_check
      _
    $region7: #{tpu_custom_call.1} parent=1 // pred_check_branch
      %25 = sbr.rel (0) target = $region9
    $region8: #{tpu_custom_call.1} parent=1 // pred_region
      %s27 = ssub.s32 1024, 1024
      %28 = vsyncadd [#allocation7], %s27
      %s29 = sshll.u32 [#allocation6], 4
      %s30 = int_to_ptr.vmem [resolvable:$true] %s29
      %35 = dma.hbm_to_vmem [thread:$0]  %s1, 1024, %s30, [#allocation7], 64, 64, 4
    $region9: #{tpu_custom_call.1} parent=1 // pred_fallthru
      _
    // Predicated region
    $region10: #{tpu_custom_call.1} parent=1 // pred_check
      _
    $region11: #{tpu_custom_call.1} parent=1 // pred_check_branch
      %37 = sbr.rel (0) target = $region13
    $region12: #{tpu_custom_call.1} parent=1 // pred_region
      %s39 = ssub.s32 1024, 1024
      %40 = vsyncadd [#allocation7], %s39
      %s41 = sshll.u32 [#allocation8], 4
      %s42 = int_to_ptr.vmem [resolvable:$true] %s41
      %47 = dma.hbm_to_vmem [thread:$0]  %s2, 1024, %s42, [#allocation7], 64, 64, 4
    $region13: #{tpu_custom_call.1} parent=1 // pred_fallthru
      _
    // Predicated region
    $region14: #{tpu_custom_call.1} parent=1 // pred_check
      _
    $region15: #{tpu_custom_call.1} parent=1 // pred_check_branch
      %49 = sbr.rel (0) target = $region17
    $region16: #{tpu_custom_call.1} parent=1 // pred_region
      _
    $region17: #{tpu_custom_call.1} parent=1 // pred_fallthru
      _
    // Predicated region
    $region18: #{tpu_custom_call.1} parent=1 // pred_check
      _
    $region19: #{tpu_custom_call.1} parent=1 // pred_check_branch
      %51 = sbr.rel (0) target = $region21
    $region20: #{tpu_custom_call.1} parent=1 // pred_region
      %52 = dma.done [#allocation4], 1024
    $region21: #{tpu_custom_call.1} parent=1 // pred_fallthru
      _
    // Predicated region
    $region22: #{tpu_custom_call.1} parent=1 // pred_check
      _
    $region23: #{tpu_custom_call.1} parent=1 // pred_check_branch
      %54 = sbr.rel (0) target = $region25
    $region24: #{tpu_custom_call.1} parent=1 // pred_region
      %55 = dma.done [#allocation7], 1024
    $region25: #{tpu_custom_call.1} parent=1 // pred_fallthru
      _
    // Predicated region
    $region26: #{tpu_custom_call.1} parent=1 // pred_check
      _
    $region27: #{tpu_custom_call.1} parent=1 // pred_check_branch
      %57 = sbr.rel (0) target = $region29
    $region28: #{tpu_custom_call.1} parent=1 // pred_region
      %58 = dma.done [#allocation7], 1024
    $region29: #{tpu_custom_call.1} parent=1 // pred_fallthru
      _
    %p60 = scmp.eq.s32.totalorder 0, 0
    // Predicated region
    $region30: #{tpu_custom_call.1} parent=1 // pred_check
      %p61 = pneg %p60
    $region31: #{tpu_custom_call.1} parent=1 // pred_check_branch
      %63 = sbr.rel (%p61) target = $region33
    $region32: #{tpu_custom_call.1} parent=1 // pred_region
      %64 = vst [vmem:[#allocation2] sm:$0xff] 0.0
      %65 = vst [vmem:[#allocation2 + $0x8] sm:$0xff] 0.0
      %66 = vst [vmem:[#allocation2 + $0x10] sm:$0xff] 0.0
      %67 = vst [vmem:[#allocation2 + $0x18] sm:$0xff] 0.0
      %68 = vst [vmem:[#allocation2 + $0x20] sm:$0xff] 0.0
      %69 = vst [vmem:[#allocation2 + $0x28] sm:$0xff] 0.0
      %70 = vst [vmem:[#allocation2 + $0x30] sm:$0xff] 0.0
      %71 = vst [vmem:[#allocation2 + $0x38] sm:$0xff] 0.0
      %72 = vst [vmem:[#allocation2 + $0x40] sm:$0xff] 0.0
      %73 = vst [vmem:[#allocation2 + $0x48] sm:$0xff] 0.0
      %74 = vst [vmem:[#allocation2 + $0x50] sm:$0xff] 0.0
      %75 = vst [vmem:[#allocation2 + $0x58] sm:$0xff] 0.0
      %76 = vst [vmem:[#allocation2 + $0x60] sm:$0xff] 0.0
      %77 = vst [vmem:[#allocation2 + $0x68] sm:$0xff] 0.0
      %78 = vst [vmem:[#allocation2 + $0x70] sm:$0xff] 0.0
      %79 = vst [vmem:[#allocation2 + $0x78] sm:$0xff] 0.0
    $region33: #{tpu_custom_call.1} parent=1 // pred_fallthru
      _
    %v80 = vld [vmem:[#allocation2] sm:$0xff]
    %v81 = vld [vmem:[#allocation2 + $0x8] sm:$0xff]
    %v82 = vld [vmem:[#allocation2 + $0x10] sm:$0xff]
    %v83 = vld [vmem:[#allocation2 + $0x18] sm:$0xff]
    %v84 = vld [vmem:[#allocation2 + $0x20] sm:$0xff]
    %v85 = vld [vmem:[#allocation2 + $0x28] sm:$0xff]
    %v86 = vld [vmem:[#allocation2 + $0x30] sm:$0xff]
    %v87 = vld [vmem:[#allocation2 + $0x38] sm:$0xff]
    %v88 = vld [vmem:[#allocation2 + $0x40] sm:$0xff]
    %v89 = vld [vmem:[#allocation2 + $0x48] sm:$0xff]
    %v90 = vld [vmem:[#allocation2 + $0x50] sm:$0xff]
    %v91 = vld [vmem:[#allocation2 + $0x58] sm:$0xff]
    %v92 = vld [vmem:[#allocation2 + $0x60] sm:$0xff]
    %v93 = vld [vmem:[#allocation2 + $0x68] sm:$0xff]
    %v94 = vld [vmem:[#allocation2 + $0x70] sm:$0xff]
    %v95 = vld [vmem:[#allocation2 + $0x78] sm:$0xff]
    %v96 = vld [vmem:[#allocation3] sm:$0xf]
    %v97 = vld [vmem:[#allocation3 + $0x4] sm:$0xf]
    %v98 = vld [vmem:[#allocation3 + $0x8] sm:$0xf]
    %v99 = vld [vmem:[#allocation3 + $0xc] sm:$0xf]
    %v100 = vld [vmem:[#allocation3 + $0x10] sm:$0xf]
    %v101 = vld [vmem:[#allocation3 + $0x14] sm:$0xf]
    %v102 = vld [vmem:[#allocation3 + $0x18] sm:$0xf]
    %v103 = vld [vmem:[#allocation3 + $0x1c] sm:$0xf]
    %v104 = vld [vmem:[#allocation3 + $0x20] sm:$0xf]
    %v105 = vld [vmem:[#allocation3 + $0x24] sm:$0xf]
    %v106 = vld [vmem:[#allocation3 + $0x28] sm:$0xf]
    %v107 = vld [vmem:[#allocation3 + $0x2c] sm:$0xf]
    %v108 = vld [vmem:[#allocation3 + $0x30] sm:$0xf]
    %v109 = vld [vmem:[#allocation3 + $0x34] sm:$0xf]
    %v110 = vld [vmem:[#allocation3 + $0x38] sm:$0xf]
    %v111 = vld [vmem:[#allocation3 + $0x3c] sm:$0xf]
    %v112 = vld [vmem:[#allocation6] sm:$0xf]
    %v113 = vld [vmem:[#allocation6 + $0x4] sm:$0xf]
    %v114 = vld [vmem:[#allocation6 + $0x8] sm:$0xf]
    %v115 = vld [vmem:[#allocation6 + $0xc] sm:$0xf]
    %v116 = vld [vmem:[#allocation6 + $0x10] sm:$0xf]
    %v117 = vld [vmem:[#allocation6 + $0x14] sm:$0xf]
    %v118 = vld [vmem:[#allocation6 + $0x18] sm:$0xf]
    %v119 = vld [vmem:[#allocation6 + $0x1c] sm:$0xf]
    %v120 = vld [vmem:[#allocation6 + $0x20] sm:$0xf]
    %v121 = vld [vmem:[#allocation6 + $0x24] sm:$0xf]
    %v122 = vld [vmem:[#allocation6 + $0x28] sm:$0xf]
    %v123 = vld [vmem:[#allocation6 + $0x2c] sm:$0xf]
    %v124 = vld [vmem:[#allocation6 + $0x30] sm:$0xf]
    %v125 = vld [vmem:[#allocation6 + $0x34] sm:$0xf]
    %v126 = vld [vmem:[#allocation6 + $0x38] sm:$0xf]
    %v127 = vld [vmem:[#allocation6 + $0x3c] sm:$0xf]
    %v144 = vunpack.c.l.b16 %v96
    %v145 = vunpack.c.l.b16 %v97
    %v146 = vunpack.c.l.b16 %v98
    %v147 = vunpack.c.l.b16 %v99
    %v148 = vunpack.c.l.b16 %v100
    %v149 = vunpack.c.l.b16 %v101
    %v150 = vunpack.c.l.b16 %v102
    %v151 = vunpack.c.l.b16 %v103
    %v152 = vunpack.c.l.b16 %v104
    %v153 = vunpack.c.l.b16 %v105
    %v154 = vunpack.c.l.b16 %v106
    %v155 = vunpack.c.l.b16 %v107
    %v156 = vunpack.c.l.b16 %v108
    %v157 = vunpack.c.l.b16 %v109
    %v158 = vunpack.c.l.b16 %v110
    %v159 = vunpack.c.l.b16 %v111
    %v160 = vpack.c.b16 %v145, %v144
    %v161 = vpack.c.b16 %v147, %v146
    %v162 = vpack.c.b16 %v149, %v148
    %v163 = vpack.c.b16 %v151, %v150
    %v164 = vpack.c.b16 %v153, %v152
    %v165 = vpack.c.b16 %v155, %v154
    %v166 = vpack.c.b16 %v157, %v156
    %v167 = vpack.c.b16 %v159, %v158
    %v192 = vunpack.c.l.b16 %v112
    %v193 = vunpack.c.l.b16 %v113
    %v194 = vunpack.c.l.b16 %v114
    %v195 = vunpack.c.l.b16 %v115
    %v196 = vunpack.c.l.b16 %v116
    %v197 = vunpack.c.l.b16 %v117
    %v198 = vunpack.c.l.b16 %v118
    %v199 = vunpack.c.l.b16 %v119
    %v200 = vunpack.c.l.b16 %v120
    %v201 = vunpack.c.l.b16 %v121
    %v202 = vunpack.c.l.b16 %v122
    %v203 = vunpack.c.l.b16 %v123
    %v204 = vunpack.c.l.b16 %v124
    %v205 = vunpack.c.l.b16 %v125
    %v206 = vunpack.c.l.b16 %v126
    %v207 = vunpack.c.l.b16 %v127
    %v208 = vpack.c.b16 %v193, %v192
    %v209 = vpack.c.b16 %v195, %v194
    %v210 = vpack.c.b16 %v197, %v196
    %v211 = vpack.c.b16 %v199, %v198
    %v212 = vpack.c.b16 %v201, %v200
    %v213 = vpack.c.b16 %v203, %v202
    %v214 = vpack.c.b16 %v205, %v204
    %v215 = vpack.c.b16 %v207, %v206
    %224 = vmatprep.subr.bf16.mxu0 0
    %225 = vmatpush1.bf16.msra.mxu0 %v208
    %226 = vmatprep.subr.bf16.mxu0 0
    %227 = vmatpush1.bf16.msra.mxu0 %v209
    %228 = vmatprep.subr.bf16.mxu0 0
    %229 = vmatpush1.bf16.msra.mxu0 %v210
    %230 = vmatprep.subr.bf16.mxu0 0
    %231 = vmatpush1.bf16.msra.mxu0 %v211
    %232 = vmatprep.subr.bf16.mxu0 0
    %233 = vmatpush1.bf16.msra.mxu0 %v212
    %234 = vmatprep.subr.bf16.mxu0 0
    %235 = vmatpush1.bf16.msra.mxu0 %v213
    %236 = vmatprep.subr.bf16.mxu0 0
    %237 = vmatpush1.bf16.msra.mxu0 %v214
    %238 = vmatprep.subr.bf16.mxu0 0
    %239 = vmatpush1.bf16.msra.mxu0 %v215
    %240 = vmatprep.subr.bf16.mxu0 0
    %241 = vmatpush1.bf16.msra.mxu0 0
    %242 = vmatprep.subr.bf16.mxu0 0
    %243 = vmatpush1.bf16.msra.mxu0 0
    %244 = vmatprep.subr.bf16.mxu0 0
    %245 = vmatpush1.bf16.msra.mxu0 0
    %246 = vmatprep.subr.bf16.mxu0 0
    %247 = vmatpush1.bf16.msra.mxu0 0
    %248 = vmatprep.subr.bf16.mxu0 0
    %249 = vmatpush1.bf16.msra.mxu0 0
    %250 = vmatprep.subr.bf16.mxu0 0
    %251 = vmatpush1.bf16.msra.mxu0 0
    %252 = vmatprep.subr.bf16.mxu0 0
    %253 = vmatpush1.bf16.msra.mxu0 0
    %254 = vmatprep.subr.bf16.mxu0 0
    %255 = vmatpush1.bf16.msra.mxu0 0
    %256 = vmatprep.mubr.bf16.mxu0 0
    %257 = vmatmul.mubr.bf16.gmra.mrb[0].mxu0 %v160
    %v258 = vpop.f32.mrb[0].mxu0
    %v259 = vadd.f32 0.0, %v258
    %v260 = vpop.f32.mrb[0].mxu0
    %v261 = vpop.f32.mrb[0].mxu0
    %v262 = vadd.f32 0.0, %v261
    %v263 = vpop.f32.mrb[0].mxu0
    %264 = vmatprep.mubr.bf16.mxu0 0
    %265 = vmatmul.mubr.bf16.gmra.mrb[0].mxu0 %v161
    %v266 = vpop.f32.mrb[0].mxu0
    %v267 = vadd.f32 0.0, %v266
    %v268 = vpop.f32.mrb[0].mxu0
    %v269 = vpop.f32.mrb[0].mxu0
    %v270 = vadd.f32 0.0, %v269
    %v271 = vpop.f32.mrb[0].mxu0
    %272 = vmatprep.mubr.bf16.mxu0 0
    %273 = vmatmul.mubr.bf16.gmra.mrb[0].mxu0 %v162
    %v274 = vpop.f32.mrb[0].mxu0
    %v275 = vadd.f32 0.0, %v274
    %v276 = vpop.f32.mrb[0].mxu0
    %v277 = vpop.f32.mrb[0].mxu0
    %v278 = vadd.f32 0.0, %v277
    %v279 = vpop.f32.mrb[0].mxu0
    %280 = vmatprep.mubr.bf16.mxu0 0
    %281 = vmatmul.mubr.bf16.gmra.mrb[0].mxu0 %v163
    %v282 = vpop.f32.mrb[0].mxu0
    %v283 = vadd.f32 0.0, %v282
    %v284 = vpop.f32.mrb[0].mxu0
    %v285 = vpop.f32.mrb[0].mxu0
    %v286 = vadd.f32 0.0, %v285
    %v287 = vpop.f32.mrb[0].mxu0
    %288 = vmatprep.mubr.bf16.mxu0 0
    %289 = vmatmul.mubr.bf16.gmra.mrb[0].mxu0 %v164
    %v290 = vpop.f32.mrb[0].mxu0
    %v291 = vadd.f32 0.0, %v290
    %v292 = vpop.f32.mrb[0].mxu0
    %v293 = vpop.f32.mrb[0].mxu0
    %v294 = vadd.f32 0.0, %v293
    %v295 = vpop.f32.mrb[0].mxu0
    %296 = vmatprep.mubr.bf16.mxu0 0
    %297 = vmatmul.mubr.bf16.gmra.mrb[0].mxu0 %v165
    %v298 = vpop.f32.mrb[0].mxu0
    %v299 = vadd.f32 0.0, %v298
    %v300 = vpop.f32.mrb[0].mxu0
    %v301 = vpop.f32.mrb[0].mxu0
    %v302 = vadd.f32 0.0, %v301
    %v303 = vpop.f32.mrb[0].mxu0
    %304 = vmatprep.mubr.bf16.mxu0 0
    %305 = vmatmul.mubr.bf16.gmra.mrb[0].mxu0 %v166
    %v306 = vpop.f32.mrb[0].mxu0
    %v307 = vadd.f32 0.0, %v306
    %v308 = vpop.f32.mrb[0].mxu0
    %v309 = vpop.f32.mrb[0].mxu0
    %v310 = vadd.f32 0.0, %v309
    %v311 = vpop.f32.mrb[0].mxu0
    %312 = vmatprep.mubr.bf16.mxu0 0
    %313 = vmatmul.mubr.bf16.gmra.mrb[0].mxu0 %v167
    %v314 = vpop.f32.mrb[0].mxu0
    %v315 = vadd.f32 0.0, %v314
    %v316 = vpop.f32.mrb[0].mxu0
    %v317 = vpop.f32.mrb[0].mxu0
    %v318 = vadd.f32 0.0, %v317
    %v319 = vpop.f32.mrb[0].mxu0
    %320 = vdwg.mxu0
    %v321 = vadd.f32 %v80, %v259
    %v322 = vadd.f32 %v81, %v262
    %v323 = vadd.f32 %v82, %v267
    %v324 = vadd.f32 %v83, %v270
    %v325 = vadd.f32 %v84, %v275
    %v326 = vadd.f32 %v85, %v278
    %v327 = vadd.f32 %v86, %v283
    %v328 = vadd.f32 %v87, %v286
    %v329 = vadd.f32 %v88, %v291
    %v330 = vadd.f32 %v89, %v294
    %v331 = vadd.f32 %v90, %v299
    %v332 = vadd.f32 %v91, %v302
    %v333 = vadd.f32 %v92, %v307
    %v334 = vadd.f32 %v93, %v310
    %v335 = vadd.f32 %v94, %v315
    %v336 = vadd.f32 %v95, %v318
    %337 = vst [vmem:[#allocation2] sm:$0xff] %v321
    %338 = vst [vmem:[#allocation2 + $0x8] sm:$0xff] %v322
    %339 = vst [vmem:[#allocation2 + $0x10] sm:$0xff] %v323
    %340 = vst [vmem:[#allocation2 + $0x18] sm:$0xff] %v324
    %341 = vst [vmem:[#allocation2 + $0x20] sm:$0xff] %v325
    %342 = vst [vmem:[#allocation2 + $0x28] sm:$0xff] %v326
    %343 = vst [vmem:[#allocation2 + $0x30] sm:$0xff] %v327
    %344 = vst [vmem:[#allocation2 + $0x38] sm:$0xff] %v328
    %345 = vst [vmem:[#allocation2 + $0x40] sm:$0xff] %v329
    %346 = vst [vmem:[#allocation2 + $0x48] sm:$0xff] %v330
    %347 = vst [vmem:[#allocation2 + $0x50] sm:$0xff] %v331
    %348 = vst [vmem:[#allocation2 + $0x58] sm:$0xff] %v332
    %349 = vst [vmem:[#allocation2 + $0x60] sm:$0xff] %v333
    %350 = vst [vmem:[#allocation2 + $0x68] sm:$0xff] %v334
    %351 = vst [vmem:[#allocation2 + $0x70] sm:$0xff] %v335
    %352 = vst [vmem:[#allocation2 + $0x78] sm:$0xff] %v336
    // Predicated region
    $region34: #{tpu_custom_call.1} parent=1 // pred_check
      %p353 = pneg %p60
    $region35: #{tpu_custom_call.1} parent=1 // pred_check_branch
      %355 = sbr.rel (%p353) target = $region37
    $region36: #{tpu_custom_call.1} parent=1 // pred_region
      %v356 = vld [vmem:[#allocation2] sm:$0xff]
      %v357 = vld [vmem:[#allocation2 + $0x8] sm:$0xff]
      %v358 = vld [vmem:[#allocation2 + $0x10] sm:$0xff]
      %v359 = vld [vmem:[#allocation2 + $0x18] sm:$0xff]
      %v360 = vld [vmem:[#allocation2 + $0x20] sm:$0xff]
      %v361 = vld [vmem:[#allocation2 + $0x28] sm:$0xff]
      %v362 = vld [vmem:[#allocation2 + $0x30] sm:$0xff]
      %v363 = vld [vmem:[#allocation2 + $0x38] sm:$0xff]
      %v364 = vld [vmem:[#allocation2 + $0x40] sm:$0xff]
      %v365 = vld [vmem:[#allocation2 + $0x48] sm:$0xff]
      %v366 = vld [vmem:[#allocation2 + $0x50] sm:$0xff]
      %v367 = vld [vmem:[#allocation2 + $0x58] sm:$0xff]
      %v368 = vld [vmem:[#allocation2 + $0x60] sm:$0xff]
      %v369 = vld [vmem:[#allocation2 + $0x68] sm:$0xff]
      %v370 = vld [vmem:[#allocation2 + $0x70] sm:$0xff]
      %v371 = vld [vmem:[#allocation2 + $0x78] sm:$0xff]
      %v372 = vpack.c.bf16 %v357, %v356
      %v373 = vpack.c.bf16 %v359, %v358
      %v374 = vpack.c.bf16 %v361, %v360
      %v375 = vpack.c.bf16 %v363, %v362
      %v376 = vpack.c.bf16 %v365, %v364
      %v377 = vpack.c.bf16 %v367, %v366
      %v378 = vpack.c.bf16 %v369, %v368
      %v379 = vpack.c.bf16 %v371, %v370
      %v380 = vld [vmem:[#allocation8] sm:$0xf]
      %v381 = vld [vmem:[#allocation8 + $0x4] sm:$0xf]
      %v382 = vld [vmem:[#allocation8 + $0x8] sm:$0xf]
      %v383 = vld [vmem:[#allocation8 + $0xc] sm:$0xf]
      %v384 = vld [vmem:[#allocation8 + $0x10] sm:$0xf]
      %v385 = vld [vmem:[#allocation8 + $0x14] sm:$0xf]
      %v386 = vld [vmem:[#allocation8 + $0x18] sm:$0xf]
      %v387 = vld [vmem:[#allocation8 + $0x1c] sm:$0xf]
      %v388 = vld [vmem:[#allocation8 + $0x20] sm:$0xf]
      %v389 = vld [vmem:[#allocation8 + $0x24] sm:$0xf]
      %v390 = vld [vmem:[#allocation8 + $0x28] sm:$0xf]
      %v391 = vld [vmem:[#allocation8 + $0x2c] sm:$0xf]
      %v392 = vld [vmem:[#allocation8 + $0x30] sm:$0xf]
      %v393 = vld [vmem:[#allocation8 + $0x34] sm:$0xf]
      %v394 = vld [vmem:[#allocation8 + $0x38] sm:$0xf]
      %v395 = vld [vmem:[#allocation8 + $0x3c] sm:$0xf]
      %v396 = vld [vmem:[%s3] sm:$0x1]
      %v398 = vlaneseq
      %v399 = vshrl.u32 %v398, 7
      %v400 = vsub.s32 0, %v399
      %v401 = vrot.slane %v396, %v400
      %v419 = vunpack.c.l.b16 %v380
      %v420 = vunpack.c.l.b16 %v381
      %v421 = vunpack.c.l.b16 %v382
      %v422 = vunpack.c.l.b16 %v383
      %v423 = vunpack.c.l.b16 %v384
      %v424 = vunpack.c.l.b16 %v385
      %v425 = vunpack.c.l.b16 %v386
      %v426 = vunpack.c.l.b16 %v387
      %v427 = vunpack.c.l.b16 %v388
      %v428 = vunpack.c.l.b16 %v389
      %v429 = vunpack.c.l.b16 %v390
      %v430 = vunpack.c.l.b16 %v391
      %v431 = vunpack.c.l.b16 %v392
      %v432 = vunpack.c.l.b16 %v393
      %v433 = vunpack.c.l.b16 %v394
      %v434 = vunpack.c.l.b16 %v395
      %v435 = vpack.c.b16 %v420, %v419
      %v436 = vpack.c.b16 %v422, %v421
      %v437 = vpack.c.b16 %v424, %v423
      %v438 = vpack.c.b16 %v426, %v425
      %v439 = vpack.c.b16 %v428, %v427
      %v440 = vpack.c.b16 %v430, %v429
      %v441 = vpack.c.b16 %v432, %v431
      %v442 = vpack.c.b16 %v434, %v433
      %451 = vmatprep.subr.bf16.mxu0 0
      %452 = vmatpush1.bf16.msra.mxu0 %v435
      %453 = vmatprep.subr.bf16.mxu0 0
      %454 = vmatpush1.bf16.msra.mxu0 %v436
      %455 = vmatprep.subr.bf16.mxu0 0
      %456 = vmatpush1.bf16.msra.mxu0 %v437
      %457 = vmatprep.subr.bf16.mxu0 0
      %458 = vmatpush1.bf16.msra.mxu0 %v438
      %459 = vmatprep.subr.bf16.mxu0 0
      %460 = vmatpush1.bf16.msra.mxu0 %v439
      %461 = vmatprep.subr.bf16.mxu0 0
      %462 = vmatpush1.bf16.msra.mxu0 %v440
      %463 = vmatprep.subr.bf16.mxu0 0
      %464 = vmatpush1.bf16.msra.mxu0 %v441
      %465 = vmatprep.subr.bf16.mxu0 0
      %466 = vmatpush1.bf16.msra.mxu0 %v442
      %467 = vmatprep.subr.bf16.mxu0 0
      %468 = vmatpush1.bf16.msra.mxu0 0
      %469 = vmatprep.subr.bf16.mxu0 0
      %470 = vmatpush1.bf16.msra.mxu0 0
      %471 = vmatprep.subr.bf16.mxu0 0
      %472 = vmatpush1.bf16.msra.mxu0 0
      %473 = vmatprep.subr.bf16.mxu0 0
      %474 = vmatpush1.bf16.msra.mxu0 0
      %475 = vmatprep.subr.bf16.mxu0 0
      %476 = vmatpush1.bf16.msra.mxu0 0
      %477 = vmatprep.subr.bf16.mxu0 0
      %478 = vmatpush1.bf16.msra.mxu0 0
      %479 = vmatprep.subr.bf16.mxu0 0
      %480 = vmatpush1.bf16.msra.mxu0 0
      %481 = vmatprep.subr.bf16.mxu0 0
      %482 = vmatpush1.bf16.msra.mxu0 0
      %483 = vmatprep.mubr.bf16.mxu0 0
      %484 = vmatmul.mubr.bf16.gmra.mrb[0].mxu0 %v372
      %v485 = vpop.f32.mrb[0].mxu0
      %v486 = vadd.f32 %v401, %v485
      %v487 = vpop.f32.mrb[0].mxu0
      %v488 = vpop.f32.mrb[0].mxu0
      %v489 = vadd.f32 %v401, %v488
      %v490 = vpop.f32.mrb[0].mxu0
      %491 = vmatprep.mubr.bf16.mxu0 0
      %492 = vmatmul.mubr.bf16.gmra.mrb[0].mxu0 %v373
      %v493 = vpop.f32.mrb[0].mxu0
      %v494 = vadd.f32 %v401, %v493
      %v495 = vpop.f32.mrb[0].mxu0
      %v496 = vpop.f32.mrb[0].mxu0
      %v497 = vadd.f32 %v401, %v496
      %v498 = vpop.f32.mrb[0].mxu0
      %499 = vmatprep.mubr.bf16.mxu0 0
      %500 = vmatmul.mubr.bf16.gmra.mrb[0].mxu0 %v374
      %v501 = vpop.f32.mrb[0].mxu0
      %v502 = vadd.f32 %v401, %v501
      %v503 = vpop.f32.mrb[0].mxu0
      %v504 = vpop.f32.mrb[0].mxu0
      %v505 = vadd.f32 %v401, %v504
      %v506 = vpop.f32.mrb[0].mxu0
      %507 = vmatprep.mubr.bf16.mxu0 0
      %508 = vmatmul.mubr.bf16.gmra.mrb[0].mxu0 %v375
      %v509 = vpop.f32.mrb[0].mxu0
      %v510 = vadd.f32 %v401, %v509
      %v511 = vpop.f32.mrb[0].mxu0
      %v512 = vpop.f32.mrb[0].mxu0
      %v513 = vadd.f32 %v401, %v512
      %v514 = vpop.f32.mrb[0].mxu0
      %515 = vmatprep.mubr.bf16.mxu0 0
      %516 = vmatmul.mubr.bf16.gmra.mrb[0].mxu0 %v376
      %v517 = vpop.f32.mrb[0].mxu0
      %v518 = vadd.f32 %v401, %v517
      %v519 = vpop.f32.mrb[0].mxu0
      %v520 = vpop.f32.mrb[0].mxu0
      %v521 = vadd.f32 %v401, %v520
      %v522 = vpop.f32.mrb[0].mxu0
      %523 = vmatprep.mubr.bf16.mxu0 0
      %524 = vmatmul.mubr.bf16.gmra.mrb[0].mxu0 %v377
      %v525 = vpop.f32.mrb[0].mxu0
      %v526 = vadd.f32 %v401, %v525
      %v527 = vpop.f32.mrb[0].mxu0
      %v528 = vpop.f32.mrb[0].mxu0
      %v529 = vadd.f32 %v401, %v528
      %v530 = vpop.f32.mrb[0].mxu0
      %531 = vmatprep.mubr.bf16.mxu0 0
      %532 = vmatmul.mubr.bf16.gmra.mrb[0].mxu0 %v378
      %v533 = vpop.f32.mrb[0].mxu0
      %v534 = vadd.f32 %v401, %v533
      %v535 = vpop.f32.mrb[0].mxu0
      %v536 = vpop.f32.mrb[0].mxu0
      %v537 = vadd.f32 %v401, %v536
      %v538 = vpop.f32.mrb[0].mxu0
      %539 = vmatprep.mubr.bf16.mxu0 0
      %540 = vmatmul.mubr.bf16.gmra.mrb[0].mxu0 %v379
      %v541 = vpop.f32.mrb[0].mxu0
      %v542 = vadd.f32 %v401, %v541
      %v543 = vpop.f32.mrb[0].mxu0
      %v544 = vpop.f32.mrb[0].mxu0
      %v545 = vadd.f32 %v401, %v544
      %v546 = vpop.f32.mrb[0].mxu0
      %547 = vdwg.mxu0
      %v548 = vmax.f32 %v486, 0.0
      %v549 = vmax.f32 %v489, 0.0
      %v550 = vmax.f32 %v494, 0.0
      %v551 = vmax.f32 %v497, 0.0
      %v552 = vmax.f32 %v502, 0.0
      %v553 = vmax.f32 %v505, 0.0
      %v554 = vmax.f32 %v510, 0.0
      %v555 = vmax.f32 %v513, 0.0
      %v556 = vmax.f32 %v518, 0.0
      %v557 = vmax.f32 %v521, 0.0
      %v558 = vmax.f32 %v526, 0.0
      %v559 = vmax.f32 %v529, 0.0
      %v560 = vmax.f32 %v534, 0.0
      %v561 = vmax.f32 %v537, 0.0
      %v562 = vmax.f32 %v542, 0.0
      %v563 = vmax.f32 %v545, 0.0
      %v564 = vpack.c.bf16 %v549, %v548
      %v565 = vpack.c.bf16 %v551, %v550
      %v566 = vpack.c.bf16 %v553, %v552
      %v567 = vpack.c.bf16 %v555, %v554
      %v568 = vpack.c.bf16 %v557, %v556
      %v569 = vpack.c.bf16 %v559, %v558
      %v570 = vpack.c.bf16 %v561, %v560
      %v571 = vpack.c.bf16 %v563, %v562
      %v580 = vunpack.c.l.b16 %v564
      %v581 = vunpack.c.h.b16 %v564
      %v582 = vunpack.c.l.b16 %v565
      %v583 = vunpack.c.h.b16 %v565
      %v584 = vunpack.c.l.b16 %v566
      %v585 = vunpack.c.h.b16 %v566
      %v586 = vunpack.c.l.b16 %v567
      %v587 = vunpack.c.h.b16 %v567
      %v588 = vunpack.c.l.b16 %v568
      %v589 = vunpack.c.h.b16 %v568
      %v590 = vunpack.c.l.b16 %v569
      %v591 = vunpack.c.h.b16 %v569
      %v592 = vunpack.c.l.b16 %v570
      %v593 = vunpack.c.h.b16 %v570
      %v594 = vunpack.c.l.b16 %v571
      %v595 = vunpack.c.h.b16 %v571
      %v596 = vpack.c.b16 %v580, %v580
      %v597 = vpack.c.b16 %v581, %v581
      %v598 = vpack.c.b16 %v582, %v582
      %v599 = vpack.c.b16 %v583, %v583
      %v600 = vpack.c.b16 %v584, %v584
      %v601 = vpack.c.b16 %v585, %v585
      %v602 = vpack.c.b16 %v586, %v586
      %v603 = vpack.c.b16 %v587, %v587
      %v604 = vpack.c.b16 %v588, %v588
      %v605 = vpack.c.b16 %v589, %v589
      %v606 = vpack.c.b16 %v590, %v590
      %v607 = vpack.c.b16 %v591, %v591
      %v608 = vpack.c.b16 %v592, %v592
      %v609 = vpack.c.b16 %v593, %v593
      %v610 = vpack.c.b16 %v594, %v594
      %v611 = vpack.c.b16 %v595, %v595
      %628 = vst [vmem:[#allocation9] sm:$0xf] %v596
      %629 = vst [vmem:[#allocation9 + $0x4] sm:$0xf] %v597
      %630 = vst [vmem:[#allocation9 + $0x8] sm:$0xf] %v598
      %631 = vst [vmem:[#allocation9 + $0xc] sm:$0xf] %v599
      %632 = vst [vmem:[#allocation9 + $0x10] sm:$0xf] %v600
      %633 = vst [vmem:[#allocation9 + $0x14] sm:$0xf] %v601
      %634 = vst [vmem:[#allocation9 + $0x18] sm:$0xf] %v602
      %635 = vst [vmem:[#allocation9 + $0x1c] sm:$0xf] %v603
      %636 = vst [vmem:[#allocation9 + $0x20] sm:$0xf] %v604
      %637 = vst [vmem:[#allocation9 + $0x24] sm:$0xf] %v605
      %638 = vst [vmem:[#allocation9 + $0x28] sm:$0xf] %v606
      %639 = vst [vmem:[#allocation9 + $0x2c] sm:$0xf] %v607
      %640 = vst [vmem:[#allocation9 + $0x30] sm:$0xf] %v608
      %641 = vst [vmem:[#allocation9 + $0x34] sm:$0xf] %v609
      %642 = vst [vmem:[#allocation9 + $0x38] sm:$0xf] %v610
      %643 = vst [vmem:[#allocation9 + $0x3c] sm:$0xf] %v611
    $region37: #{tpu_custom_call.1} parent=1 // pred_fallthru
      _
    // Predicated region
    $region38: #{tpu_custom_call.1} parent=1 // pred_check
      _
    $region39: #{tpu_custom_call.1} parent=1 // pred_check_branch
      %645 = sbr.rel (0) target = $region41
    $region40: #{tpu_custom_call.1} parent=1 // pred_region
      %s647 = ssub.s32 1024, 1024
      %648 = vsyncadd [#allocation5], %s647
      %s649 = sshll.u32 [#allocation9], 4
      %s650 = int_to_ptr.vmem [resolvable:$true] %s649
      %655 = dma.vmem_to_hbm [thread:$0]  %s650, 1024, %s4, [#allocation5], 64, 64, 4
    $region41: #{tpu_custom_call.1} parent=1 // pred_fallthru
      _
    // Predicated region
    $region42: #{tpu_custom_call.1} parent=1 // pred_check
      _
    $region43: #{tpu_custom_call.1} parent=1 // pred_check_branch
      %657 = sbr.rel (0) target = $region45
    $region44: #{tpu_custom_call.1} parent=1 // pred_region
      %658 = dma.done [#allocation5], 1024
    $region45: #{tpu_custom_call.1} parent=1 // pred_fallthru
      _
    %659 = vsyncpa [#allocation4], 1
    %660 = vsyncpa [#allocation7], 1
    %661 = vsyncpa [#allocation5], 1

</llo_original>
